<compile_context>
chip_gen: v6e
topology: v6e:2x2x1
jax: 0.10.0
libtpu: 0.0.40
codegen_flags: <defaults>
</compile_context>

<pallas_src>
import numpy as np
import jax
import jax.numpy as jnp
from jax.experimental import pallas as pl
from jax.experimental.pallas import tpu as pltpu

# ---- module "args" (small, deterministic, synthetic) -------------------------
VOCAB        = 50
EMBED_DIM    = 32
KERNEL_NUM   = 8
KERNEL_SIZES = (3, 4, 5)
DROPOUT_P    = 0.5            # eval-mode dropout == identity
SIAMESE      = False
SEQ_LEN      = 16
BATCH        = 2

FEAT       = len(KERNEL_SIZES) * KERNEL_NUM      # 24
MAX_KS     = max(KERNEL_SIZES)                   # 5
BL         = BATCH * SEQ_LEN                     # 32 rows (batch*time on sublanes)
VOCAB_LANE = 128                                 # one-hot block width: lane/vreg aligned

assert VOCAB <= VOCAB_LANE, "one-hot gather assumes VOCAB fits in one 128-lane block"
# Required: every sequence has at least one valid window per kernel size; masking
# invalid (wrapped / truncated) windows to 0 post-ReLU is only correct under this
# assumption and because ReLU outputs are >= 0.
assert SEQ_LEN >= MAX_KS, "SEQ_LEN must be >= max kernel size"


# ---- Pallas kernel: gather + conv + relu + maxpool + linear, one invocation ---
def textcnn_kernel(tok_ref, wfold_ref, tail_ref, mask_ref, o_ref):
    # tok_ref   : (BL, 1)               int32  flattened tokens (row r = b*L + t)
    # wfold_ref : (MAX_KS*128, FEAT)    f32    per-tap folded weights
    #                                          (rows j*128+v = table[v] @ wconv_tap_j,
    #                                           zero rows for v >= VOCAB, zero cols
    #                                           for taps >= ks of a group)
    # tail_ref  : (3, FEAT)             f32    rows = [conv bias | linear w | linear b]
    # mask_ref  : (BL, FEAT)            f32    1.0 where the conv window fits in the
    #                                          sequence, else 0.0 (static, host-built)
    # o_ref     : (BATCH, 1)            f32

    # 1) one-hot tokens (exact row selection); one 128-lane block per tap, shifted
    #    along sublanes so row r of block j selects token r+j (wrap-around rows are
    #    zeroed by the mask below).  The rolls are independent (no serial chain).
    tok = tok_ref[...]                                             # (BL, 1) i32
    vocab_iota = jax.lax.broadcasted_iota(jnp.int32, (BL, VOCAB_LANE), 1)
    onehot = (tok == vocab_iota).astype(jnp.float32)               # (BL, 128)
    shifted = [onehot]
    for j in range(1, MAX_KS):
        shifted.append(pltpu.roll(onehot, shift=BL - j, axis=0))   # row r <- row r+j
    big = jnp.concatenate(shifted, axis=1)                         # (BL, MAX_KS*128)

    # 2) the ONLY MXU matmul: embedding gather + all conv taps of all kernel sizes.
    conv = jnp.dot(big, wfold_ref[...],
                   preferred_element_type=jnp.float32)             # (BL, FEAT)

    # 3) bias + ReLU, then zero invalid time positions (precomputed static mask;
    #    safe because post-ReLU values are >= 0 and >=1 valid window exists).
    tail = tail_ref[...]                                           # (3, FEAT)
    act = jnp.maximum(conv + tail[0:1, :], 0.0) * mask_ref[...]    # (BL, FEAT)

    # 4) per-sequence max-pool over time (static 8-aligned sublane slices) and the
    #    fused linear head, vectorized over the batch.
    # TODO(synk): training-mode dropout would draw a mask with pltpu.prng_seed /
    # pltpu.prng_random_bits here; eval mode is the identity.
    pooled = jnp.concatenate(
        [jnp.max(act[b * SEQ_LEN:(b + 1) * SEQ_LEN, :], axis=0, keepdims=True)
         for b in range(BATCH)],
        axis=0)                                                    # (BATCH, FEAT)
    wl = tail[1:2, :]                                              # (1, FEAT)
    y = jnp.sum(pooled * wl, axis=1, keepdims=True) + tail[2:3, 0:1]   # (BATCH, 1)
    o_ref[...] = y


# ---- one-time, per-model parameter packing (hoisted out of the forward path) --
def pack_params(params):
    e, k = EMBED_DIM, KERNEL_NUM
    table = jnp.pad(params["embed"].astype(jnp.float32),
                    ((0, VOCAB_LANE - VOCAB), (0, 0)))             # (128, E)
    blocks = []
    for j in range(MAX_KS):                    # tap-major; zero-pad missing taps
        cols = []
        for g, ks in enumerate(KERNEL_SIZES):
            if j < ks:
                cols.append(params["conv_w"][g][j])                # (E, K)
            else:
                cols.append(jnp.zeros((e, k), jnp.float32))
        w_j = jnp.concatenate(cols, axis=1)                        # (E, FEAT)
        # fold the embedding table into the tap weights (exact modulo f32 matmul
        # precision; HIGHEST keeps it true f32 on the host/XLA side)
        blocks.append(jnp.dot(table, w_j,
                              precision=jax.lax.Precision.HIGHEST))   # (128, FEAT)
    wfold = jnp.concatenate(blocks, axis=0)                        # (MAX_KS*128, FEAT)

    bias_row = jnp.concatenate([b.reshape(k) for b in params["conv_b"]])  # (FEAT,)
    wl_row = params["lin_w"].reshape(FEAT)                         # (FEAT,)
    bl_row = jnp.broadcast_to(params["lin_b"].reshape(1), (FEAT,))
    tail = jnp.stack([bias_row, wl_row, bl_row], axis=0)           # (3, FEAT)

    # static validity mask: window starting at time t with width ks fits iff
    # t + ks <= SEQ_LEN (purely a function of constants)
    pos = np.arange(BL) % SEQ_LEN
    ks_per_col = np.repeat(np.asarray(KERNEL_SIZES, np.int32), KERNEL_NUM)
    mask = jnp.asarray((pos[:, None] + ks_per_col[None, :]) <= SEQ_LEN,
                       dtype=jnp.float32)                          # (BL, FEAT)
    return wfold, tail, mask


@jax.jit
def textcnn_forward(tokens, wfold, tail, mask):
    # forward(): x.reshape(B, -1) is the identity for 2-D token input (non-siamese).
    tok2d = tokens.reshape(BL, 1).astype(jnp.int32)
    out = pl.pallas_call(
        textcnn_kernel,
        out_shape=jax.ShapeDtypeStruct((BATCH, 1), jnp.float32),
        # No grid / BlockSpecs: the whole (few-hundred-KB) problem runs in a single
        # invocation with every operand whole-array resident in VMEM.
    )(tok2d, wfold, tail, mask)
    return out


# ---- Pure-JAX reference (PyTorch semantics, for correctness check) ------------
def textcnn_reference(tokens, params):
    emb = params["embed"][tokens].astype(jnp.float32)        # (B, L, E)
    feats = []
    for ks, w, b in zip(KERNEL_SIZES, params["conv_w"], params["conv_b"]):
        t = SEQ_LEN - ks + 1
        acc = jnp.zeros((BATCH, t, KERNEL_NUM), jnp.float32)
        for j in range(ks):
            acc = acc + jnp.einsum("ble,ek->blk", emb[:, j:j + t, :], w[j])
        acc = jax.nn.relu(acc + b[None])                      # (B, t, K)
        feats.append(jnp.max(acc, axis=1))                    # (B, K)
    f = jnp.concatenate(feats, axis=1)                        # (B, FEAT)
    return f @ params["lin_w"] + params["lin_b"]              # (B, 1)


# ---- Deterministic parameter init --------------------------------------------
def init_params(key):
    keys = jax.random.split(key, 4 + 2 * len(KERNEL_SIZES))
    params = {
        "embed": jax.random.normal(keys[0], (VOCAB, EMBED_DIM), jnp.float32) * 0.1,
        "conv_w": [],
        "conv_b": [],
        # nn.Linear(FEAT, 1): torch weight (1, FEAT) -> stored transposed (FEAT, 1)
        "lin_w": jax.random.normal(keys[1], (FEAT, 1), jnp.float32) * 0.1,
        "lin_b": jax.random.normal(keys[2], (1, 1), jnp.float32) * 0.1,
    }
    for i, ks in enumerate(KERNEL_SIZES):
        # torch Conv2d weight (K, 1, ks, E) -> stored as (ks, E, K)
        params["conv_w"].append(
            jax.random.normal(keys[3 + 2 * i], (ks, EMBED_DIM, KERNEL_NUM),
                              jnp.float32) * 0.1)
        params["conv_b"].append(
            jax.random.normal(keys[4 + 2 * i], (1, KERNEL_NUM), jnp.float32) * 0.1)
    return params


if __name__ == "__main__":
    key = jax.random.PRNGKey(0)
    pkey, tkey = jax.random.split(key)
    params = init_params(pkey)
    tokens = jax.random.randint(tkey, (BATCH, SEQ_LEN), 0, VOCAB, dtype=jnp.int32)

    # pack once per model (outside the per-call path)
    wfold, tail, mask = jax.block_until_ready(pack_params(params))

    out = jax.block_until_ready(textcnn_forward(tokens, wfold, tail, mask))
    ref = jax.block_until_ready(textcnn_reference(tokens, params))

    assert out.shape == (BATCH, 1), out.shape
    assert jnp.allclose(out, ref, atol=1e-4, rtol=1e-4), (out, ref)
    print("KERNEL_OK")
</pallas_src>

<mosaic_0001>
module attributes {stable_mosaic.version = 11 : i64} {
  func.func @textcnn_kernel(%arg0: memref<32x1xi32, #tpu.memory_space<vmem>>, %arg1: memref<640x24xf32, #tpu.memory_space<vmem>>, %arg2: memref<3x24xf32, #tpu.memory_space<vmem>>, %arg3: memref<32x24xf32, #tpu.memory_space<vmem>>, %arg4: memref<2x1xf32, #tpu.memory_space<vmem>>) attributes {dimension_semantics = [], scalar_prefetch = 0 : i64, scratch_operands = 0 : i64, tpu.core_type = #tpu.core_type<tc>} {
    %c0 = arith.constant 0 : index
    %c0_0 = arith.constant 0 : index
    %0 = vector.load %arg0[%c0, %c0_0] : memref<32x1xi32, #tpu.memory_space<vmem>>, vector<32x1xi32>
    %1 = tpu.iota {dimensions = array<i32: 1>} : vector<32x128xi32>
    %2 = vector.broadcast %0 : vector<32x1xi32> to vector<32x128xi32>
    %3 = arith.cmpi eq, %2, %1 : vector<32x128xi32>
    %4 = arith.extui %3 : vector<32x128xi1> to vector<32x128xi32>
    %5 = arith.sitofp %4 : vector<32x128xi32> to vector<32x128xf32>
    %c31_i32 = arith.constant 31 : i32
    %6 = tpu.dynamic_rotate %5 by %c31_i32 dim 0 : vector<32x128xf32>, i32 -> vector<32x128xf32>
    %c30_i32 = arith.constant 30 : i32
    %7 = tpu.dynamic_rotate %5 by %c30_i32 dim 0 : vector<32x128xf32>, i32 -> vector<32x128xf32>
    %c29_i32 = arith.constant 29 : i32
    %8 = tpu.dynamic_rotate %5 by %c29_i32 dim 0 : vector<32x128xf32>, i32 -> vector<32x128xf32>
    %c28_i32 = arith.constant 28 : i32
    %9 = tpu.dynamic_rotate %5 by %c28_i32 dim 0 : vector<32x128xf32>, i32 -> vector<32x128xf32>
    %10 = tpu.concatenate %5, %6, %7, %8, %9 in 1 : vector<32x128xf32>, vector<32x128xf32>, vector<32x128xf32>, vector<32x128xf32>, vector<32x128xf32> -> vector<32x640xf32>
    %c0_1 = arith.constant 0 : index
    %c0_2 = arith.constant 0 : index
    %11 = vector.load %arg1[%c0_1, %c0_2] : memref<640x24xf32, #tpu.memory_space<vmem>>, vector<640x24xf32>
    %cst = arith.constant dense<0.000000e+00> : vector<32x24xf32>
    %12 = tpu.matmul %10, %11, %cst {dimension_numbers = #tpu.dot_dimension_numbers<[1], [0], [0], [1], [0, 0, 1, 1], [], []>} : vector<32x640xf32>, vector<640x24xf32>, vector<32x24xf32> -> vector<32x24xf32>
    %c0_3 = arith.constant 0 : index
    %c0_4 = arith.constant 0 : index
    %13 = vector.load %arg2[%c0_3, %c0_4] : memref<3x24xf32, #tpu.memory_space<vmem>>, vector<3x24xf32>
    %14 = vector.extract_strided_slice %13 {offsets = [0, 0], sizes = [1, 24], strides = [1, 1]} : vector<3x24xf32> to vector<1x24xf32>
    %15 = vector.broadcast %14 : vector<1x24xf32> to vector<32x24xf32>
    %16 = arith.addf %12, %15 : vector<32x24xf32>
    %cst_5 = arith.constant 0.000000e+00 : f32
    %17 = vector.broadcast %cst_5 : f32 to vector<32x24xf32>
    %18 = arith.maximumf %16, %17 : vector<32x24xf32>
    %c0_6 = arith.constant 0 : index
    %c0_7 = arith.constant 0 : index
    %19 = vector.load %arg3[%c0_6, %c0_7] : memref<32x24xf32, #tpu.memory_space<vmem>>, vector<32x24xf32>
    %20 = arith.mulf %18, %19 : vector<32x24xf32>
    %21 = vector.extract_strided_slice %20 {offsets = [0, 0], sizes = [16, 24], strides = [1, 1]} : vector<32x24xf32> to vector<16x24xf32>
    %cst_8 = arith.constant dense<0xFF800000> : vector<24xf32>
    %22 = vector.multi_reduction <maximumf>, %21, %cst_8 [0] : vector<16x24xf32> to vector<24xf32>
    %23 = vector.shape_cast %22 : vector<24xf32> to vector<1x24xf32>
    %24 = vector.extract_strided_slice %20 {offsets = [16, 0], sizes = [16, 24], strides = [1, 1]} : vector<32x24xf32> to vector<16x24xf32>
    %cst_9 = arith.constant dense<0xFF800000> : vector<24xf32>
    %25 = vector.multi_reduction <maximumf>, %24, %cst_9 [0] : vector<16x24xf32> to vector<24xf32>
    %26 = vector.shape_cast %25 : vector<24xf32> to vector<1x24xf32>
    %27 = tpu.concatenate %23, %26 in 0 : vector<1x24xf32>, vector<1x24xf32> -> vector<2x24xf32>
    %28 = vector.extract_strided_slice %13 {offsets = [1, 0], sizes = [1, 24], strides = [1, 1]} : vector<3x24xf32> to vector<1x24xf32>
    %29 = vector.broadcast %28 : vector<1x24xf32> to vector<2x24xf32>
    %30 = arith.mulf %27, %29 : vector<2x24xf32>
    %cst_10 = arith.constant dense<0.000000e+00> : vector<2xf32>
    %31 = vector.multi_reduction <add>, %30, %cst_10 [1] : vector<2x24xf32> to vector<2xf32>
    %32 = vector.shape_cast %31 : vector<2xf32> to vector<2x1xf32>
    %33 = vector.extract_strided_slice %13 {offsets = [2, 0], sizes = [1, 1], strides = [1, 1]} : vector<3x24xf32> to vector<1x1xf32>
    %34 = vector.broadcast %33 : vector<1x1xf32> to vector<2x1xf32>
    %35 = arith.addf %32, %34 : vector<2x1xf32>
    %c0_11 = arith.constant 0 : index
    %c0_12 = arith.constant 0 : index
    %36 = vector.load %arg4[%c0_11, %c0_12] : memref<2x1xf32, #tpu.memory_space<vmem>>, vector<2x1xf32>
    tpu.vector_store %arg4[%c0_11, %c0_12], %35 {strides = array<i32>} : memref<2x1xf32, #tpu.memory_space<vmem>>, vector<2x1xf32>,
    return
  }
}

</mosaic_0001>

<llo_original>
// kernel: textcnn_forward.1
$region0: #{textcnn_forward.1}
  #allocation0 [shape = 'u32[]', space=smem, size = 0x4, offset = 0x4, fixed_abs, tag = 'smem constant byte address 0x4 - core index']
  #allocation1 [shape = 'u32[144,128]{1,0:T(1,128)}', space=vmem, size = 0x12000, scoped, tag = 'internal scratch']
  %s0 = inlined_call_operand.vmem [shape: s32[32,1], index: 0, kind: input, shape index: {}]
  %s1 = inlined_call_operand.vmem [shape: f32[640,24], index: 1, kind: input, shape index: {}]
  %s2 = inlined_call_operand.vmem [shape: f32[3,24], index: 2, kind: input, shape index: {}]
  %s3 = inlined_call_operand.vmem [shape: f32[32,24], index: 3, kind: input, shape index: {}]
  %s4 = inlined_call_operand.vmem [shape: f32[2,1], index: 4, kind: output, shape index: {}]
  %s5 = sld [smem:[#allocation0]]
  $region26: #{textcnn_forward.1} parent=0
    _
  %s7 = ssub.s32 1, %s5
  %s8 = scalar_select 0, %s7, %s5
  // Predicated region
  $region2: #{textcnn_forward.1} parent=0 // pred_check
    _
  $region3: #{textcnn_forward.1} parent=0 // pred_check_branch
    %10 = sbr.rel (0) target = $region5
  $region4: #{textcnn_forward.1} parent=0 // pred_region
    _
  $region5: #{textcnn_forward.1} parent=0 // pred_fallthru
    _
  // Predicated region
  $region6: #{textcnn_forward.1} parent=0 // pred_check
    _
  $region7: #{textcnn_forward.1} parent=0 // pred_check_branch
    %12 = sbr.rel (0) target = $region9
  $region8: #{textcnn_forward.1} parent=0 // pred_region
    _
  $region9: #{textcnn_forward.1} parent=0 // pred_fallthru
    _
  // Predicated region
  $region10: #{textcnn_forward.1} parent=0 // pred_check
    _
  $region11: #{textcnn_forward.1} parent=0 // pred_check_branch
    %14 = sbr.rel (0) target = $region13
  $region12: #{textcnn_forward.1} parent=0 // pred_region
    _
  $region13: #{textcnn_forward.1} parent=0 // pred_fallthru
    _
  // Predicated region
  $region14: #{textcnn_forward.1} parent=0 // pred_check
    _
  $region15: #{textcnn_forward.1} parent=0 // pred_check_branch
    %16 = sbr.rel (0) target = $region17
  $region16: #{textcnn_forward.1} parent=0 // pred_region
    _
  $region17: #{textcnn_forward.1} parent=0 // pred_fallthru
    _
  %v17 = vld [vmem:[%s0] sm:$0xff]
  %v18 = vld [vmem:[%s0 + $0x8] sm:$0xff]
  %v19 = vld [vmem:[%s0 + $0x10] sm:$0xff]
  %v20 = vld [vmem:[%s0 + $0x18] sm:$0xff]
  %v21 = vlaneseq
  %v22 = vand.u32 %v21, 127
  %23 = vset.pattern.permute.xlu0 0
  %24 = vperm.xlu0 %23, %v17
  %v25 = vpop.permute.xlu0 %24
  %26 = vset.pattern.permute.xlu0 0
  %27 = vperm.xlu0 %26, %v18
  %v28 = vpop.permute.xlu0 %27
  %29 = vset.pattern.permute.xlu0 0
  %30 = vperm.xlu0 %29, %v19
  %v31 = vpop.permute.xlu0 %30
  %32 = vset.pattern.permute.xlu0 0
  %33 = vperm.xlu0 %32, %v20
  %v34 = vpop.permute.xlu0 %33
  %vm35 = vcmp.eq.s32.totalorder %v25, %v22
  %vm36 = vcmp.eq.s32.totalorder %v28, %v22
  %vm37 = vcmp.eq.s32.totalorder %v31, %v22
  %vm38 = vcmp.eq.s32.totalorder %v34, %v22
  %v39 = vsel %vm35, 1, 0
  %v40 = vsel %vm36, 1, 0
  %v41 = vsel %vm37, 1, 0
  %v42 = vsel %vm38, 1, 0
  %v43 = vcvt.s32.f32 %v39
  %v44 = vcvt.s32.f32 %v40
  %v45 = vcvt.s32.f32 %v41
  %v46 = vcvt.s32.f32 %v42
  %v47 = vrot.slane %v43, 1
  %v48 = vrot.slane %v44, 1
  %v49 = vrot.slane %v45, 1
  %v50 = vrot.slane %v46, 1
  %v51 = vlaneseq
  %v52 = vshrl.u32 %v51, 7
  %vm53 = vcmp.lt.s32.totalorder %v52, 7
  %v54 = vsel %vm53, %v49, %v50
  %v55 = vsel %vm53, %v48, %v49
  %v56 = vsel %vm53, %v47, %v48
  %v57 = vsel %vm53, %v50, %v47
  %v58 = vrot.slane %v43, 2
  %v59 = vrot.slane %v44, 2
  %v60 = vrot.slane %v45, 2
  %v61 = vrot.slane %v46, 2
  %vm62 = vcmp.lt.s32.totalorder %v52, 6
  %v63 = vsel %vm62, %v60, %v61
  %v64 = vsel %vm62, %v59, %v60
  %v65 = vsel %vm62, %v58, %v59
  %v66 = vsel %vm62, %v61, %v58
  %v67 = vrot.slane %v43, 3
  %v68 = vrot.slane %v44, 3
  %v69 = vrot.slane %v45, 3
  %v70 = vrot.slane %v46, 3
  %vm71 = vcmp.lt.s32.totalorder %v52, 5
  %v72 = vsel %vm71, %v69, %v70
  %v73 = vsel %vm71, %v68, %v69
  %v74 = vsel %vm71, %v67, %v68
  %v75 = vsel %vm71, %v70, %v67
  %v76 = vrot.slane %v43, 4
  %v77 = vrot.slane %v44, 4
  %v78 = vrot.slane %v45, 4
  %v79 = vrot.slane %v46, 4
  %vm80 = vcmp.lt.s32.totalorder %v52, 4
  %v81 = vsel %vm80, %v78, %v79
  %v82 = vsel %vm80, %v77, %v78
  %v83 = vsel %vm80, %v76, %v77
  %v84 = vsel %vm80, %v79, %v76
  %v85 = vld [vmem:[%s1] sm:$0xff]
  %v86 = vld [vmem:[%s1 + $0x8] sm:$0xff]
  %v87 = vld [vmem:[%s1 + $0x10] sm:$0xff]
  %v88 = vld [vmem:[%s1 + $0x18] sm:$0xff]
  %v89 = vld [vmem:[%s1 + $0x20] sm:$0xff]
  %v90 = vld [vmem:[%s1 + $0x28] sm:$0xff]
  %v91 = vld [vmem:[%s1 + $0x30] sm:$0xff]
  %v92 = vld [vmem:[%s1 + $0x38] sm:$0xff]
  %v93 = vld [vmem:[%s1 + $0x40] sm:$0xff]
  %v94 = vld [vmem:[%s1 + $0x48] sm:$0xff]
  %v95 = vld [vmem:[%s1 + $0x50] sm:$0xff]
  %v96 = vld [vmem:[%s1 + $0x58] sm:$0xff]
  %v97 = vld [vmem:[%s1 + $0x60] sm:$0xff]
  %v98 = vld [vmem:[%s1 + $0x68] sm:$0xff]
  %v99 = vld [vmem:[%s1 + $0x70] sm:$0xff]
  %v100 = vld [vmem:[%s1 + $0x78] sm:$0xff]
  %v101 = vld [vmem:[%s1 + $0x80] sm:$0xff]
  %v102 = vld [vmem:[%s1 + $0x88] sm:$0xff]
  %v103 = vld [vmem:[%s1 + $0x90] sm:$0xff]
  %v104 = vld [vmem:[%s1 + $0x98] sm:$0xff]
  %v105 = vld [vmem:[%s1 + $0xa0] sm:$0xff]
  %v106 = vld [vmem:[%s1 + $0xa8] sm:$0xff]
  %v107 = vld [vmem:[%s1 + $0xb0] sm:$0xff]
  %v108 = vld [vmem:[%s1 + $0xb8] sm:$0xff]
  %v109 = vld [vmem:[%s1 + $0xc0] sm:$0xff]
  %v110 = vld [vmem:[%s1 + $0xc8] sm:$0xff]
  %v111 = vld [vmem:[%s1 + $0xd0] sm:$0xff]
  %v112 = vld [vmem:[%s1 + $0xd8] sm:$0xff]
  %v113 = vld [vmem:[%s1 + $0xe0] sm:$0xff]
  %v114 = vld [vmem:[%s1 + $0xe8] sm:$0xff]
  %v115 = vld [vmem:[%s1 + $0xf0] sm:$0xff]
  %v116 = vld [vmem:[%s1 + $0xf8] sm:$0xff]
  %v117 = vld [vmem:[%s1 + $0x100] sm:$0xff]
  %v118 = vld [vmem:[%s1 + $0x108] sm:$0xff]
  %v119 = vld [vmem:[%s1 + $0x110] sm:$0xff]
  %v120 = vld [vmem:[%s1 + $0x118] sm:$0xff]
  %v121 = vld [vmem:[%s1 + $0x120] sm:$0xff]
  %v122 = vld [vmem:[%s1 + $0x128] sm:$0xff]
  %v123 = vld [vmem:[%s1 + $0x130] sm:$0xff]
  %v124 = vld [vmem:[%s1 + $0x138] sm:$0xff]
  %v125 = vld [vmem:[%s1 + $0x140] sm:$0xff]
  %v126 = vld [vmem:[%s1 + $0x148] sm:$0xff]
  %v127 = vld [vmem:[%s1 + $0x150] sm:$0xff]
  %v128 = vld [vmem:[%s1 + $0x158] sm:$0xff]
  %v129 = vld [vmem:[%s1 + $0x160] sm:$0xff]
  %v130 = vld [vmem:[%s1 + $0x168] sm:$0xff]
  %v131 = vld [vmem:[%s1 + $0x170] sm:$0xff]
  %v132 = vld [vmem:[%s1 + $0x178] sm:$0xff]
  %v133 = vld [vmem:[%s1 + $0x180] sm:$0xff]
  %v134 = vld [vmem:[%s1 + $0x188] sm:$0xff]
  %v135 = vld [vmem:[%s1 + $0x190] sm:$0xff]
  %v136 = vld [vmem:[%s1 + $0x198] sm:$0xff]
  %v137 = vld [vmem:[%s1 + $0x1a0] sm:$0xff]
  %v138 = vld [vmem:[%s1 + $0x1a8] sm:$0xff]
  %v139 = vld [vmem:[%s1 + $0x1b0] sm:$0xff]
  %v140 = vld [vmem:[%s1 + $0x1b8] sm:$0xff]
  %v141 = vld [vmem:[%s1 + $0x1c0] sm:$0xff]
  %v142 = vld [vmem:[%s1 + $0x1c8] sm:$0xff]
  %v143 = vld [vmem:[%s1 + $0x1d0] sm:$0xff]
  %v144 = vld [vmem:[%s1 + $0x1d8] sm:$0xff]
  %v145 = vld [vmem:[%s1 + $0x1e0] sm:$0xff]
  %v146 = vld [vmem:[%s1 + $0x1e8] sm:$0xff]
  %v147 = vld [vmem:[%s1 + $0x1f0] sm:$0xff]
  %v148 = vld [vmem:[%s1 + $0x1f8] sm:$0xff]
  %v149 = vld [vmem:[%s1 + $0x200] sm:$0xff]
  %v150 = vld [vmem:[%s1 + $0x208] sm:$0xff]
  %v151 = vld [vmem:[%s1 + $0x210] sm:$0xff]
  %v152 = vld [vmem:[%s1 + $0x218] sm:$0xff]
  %v153 = vld [vmem:[%s1 + $0x220] sm:$0xff]
  %v154 = vld [vmem:[%s1 + $0x228] sm:$0xff]
  %v155 = vld [vmem:[%s1 + $0x230] sm:$0xff]
  %v156 = vld [vmem:[%s1 + $0x238] sm:$0xff]
  %v157 = vld [vmem:[%s1 + $0x240] sm:$0xff]
  %v158 = vld [vmem:[%s1 + $0x248] sm:$0xff]
  %v159 = vld [vmem:[%s1 + $0x250] sm:$0xff]
  %v160 = vld [vmem:[%s1 + $0x258] sm:$0xff]
  %v161 = vld [vmem:[%s1 + $0x260] sm:$0xff]
  %v162 = vld [vmem:[%s1 + $0x268] sm:$0xff]
  %v163 = vld [vmem:[%s1 + $0x270] sm:$0xff]
  %v164 = vld [vmem:[%s1 + $0x278] sm:$0xff]
  %v165 = vld [vmem:[%s2] sm:$0x7]
  %v166 = vlaneseq
  %v167 = vshrl.u32 %v166, 7
  %v168 = vsub.s32 0, %v167
  %v169 = vrot.slane %v165, %v168
  %170 = vmatprep.subr.mxu0 0.0
  %171 = vmatpush1.msra.mxu0 %v100
  %172 = vmatprep.subr.mxu0 0.0
  %173 = vmatpush1.msra.mxu0 %v99
  %174 = vmatprep.subr.mxu0 0.0
  %175 = vmatpush1.msra.mxu0 %v98
  %176 = vmatprep.subr.mxu0 0.0
  %177 = vmatpush1.msra.mxu0 %v97
  %178 = vmatprep.subr.mxu0 0.0
  %179 = vmatpush1.msra.mxu0 %v96
  %180 = vmatprep.subr.mxu0 0.0
  %181 = vmatpush1.msra.mxu0 %v95
  %182 = vmatprep.subr.mxu0 0.0
  %183 = vmatpush1.msra.mxu0 %v94
  %184 = vmatprep.subr.mxu0 0.0
  %185 = vmatpush1.msra.mxu0 %v93
  %186 = vmatprep.subr.mxu0 0.0
  %187 = vmatpush1.msra.mxu0 %v92
  %188 = vmatprep.subr.mxu0 0.0
  %189 = vmatpush1.msra.mxu0 %v91
  %190 = vmatprep.subr.mxu0 0.0
  %191 = vmatpush1.msra.mxu0 %v90
  %192 = vmatprep.subr.mxu0 0.0
  %193 = vmatpush1.msra.mxu0 %v89
  %194 = vmatprep.subr.mxu0 0.0
  %195 = vmatpush1.msra.mxu0 %v88
  %196 = vmatprep.subr.mxu0 0.0
  %197 = vmatpush1.msra.mxu0 %v87
  %198 = vmatprep.subr.mxu0 0.0
  %199 = vmatpush1.msra.mxu0 %v86
  %200 = vmatprep.subr.mxu0 0.0
  %201 = vmatpush1.msra.mxu0 %v85
  %202 = vmatprep.subr.mxu0 0.0
  %203 = vmatpush2.msra.mxu0 %v116
  %204 = vmatprep.subr.mxu0 0.0
  %205 = vmatpush2.msra.mxu0 %v115
  %206 = vmatprep.subr.mxu0 0.0
  %207 = vmatpush2.msra.mxu0 %v114
  %208 = vmatprep.subr.mxu0 0.0
  %209 = vmatpush2.msra.mxu0 %v113
  %210 = vmatprep.subr.mxu0 0.0
  %211 = vmatpush2.msra.mxu0 %v112
  %212 = vmatprep.subr.mxu0 0.0
  %213 = vmatpush2.msra.mxu0 %v111
  %214 = vmatprep.subr.mxu0 0.0
  %215 = vmatpush2.msra.mxu0 %v110
  %216 = vmatprep.subr.mxu0 0.0
  %217 = vmatpush2.msra.mxu0 %v109
  %218 = vmatprep.subr.mxu0 0.0
  %219 = vmatpush2.msra.mxu0 %v108
  %220 = vmatprep.subr.mxu0 0.0
  %221 = vmatpush2.msra.mxu0 %v107
  %222 = vmatprep.subr.mxu0 0.0
  %223 = vmatpush2.msra.mxu0 %v106
  %224 = vmatprep.subr.mxu0 0.0
  %225 = vmatpush2.msra.mxu0 %v105
  %226 = vmatprep.subr.mxu0 0.0
  %227 = vmatpush2.msra.mxu0 %v104
  %228 = vmatprep.subr.mxu0 0.0
  %229 = vmatpush2.msra.mxu0 %v103
  %230 = vmatprep.subr.mxu0 0.0
  %231 = vmatpush2.msra.mxu0 %v102
  %232 = vmatprep.subr.mxu0 0.0
  %233 = vmatpush2.msra.mxu0 %v101
  %234 = vmatprep.mubr.f32.mxu0 %v56
  %235 = vmatmul.mubr.f32.gmra.mxu0 %v43
  %v236 = vpop.f32.mrf.mxu0
  %v237 = vadd.f32 %v169, %v236
  %v238 = vpop.f32.mrf.mxu0
  %239 = vmatprep.mubr.f32.mxu0 %v55
  %240 = vmatmul.mubr.f32.gmra.mxu0 %v44
  %v241 = vpop.f32.mrf.mxu0
  %v242 = vadd.f32 %v169, %v241
  %v243 = vpop.f32.mrf.mxu0
  %244 = vmatprep.mubr.f32.mxu0 %v54
  %245 = vmatmul.mubr.f32.gmra.mxu0 %v45
  %v246 = vpop.f32.mrf.mxu0
  %v247 = vadd.f32 %v169, %v246
  %v248 = vpop.f32.mrf.mxu0
  %249 = vmatprep.mubr.f32.mxu0 %v57
  %250 = vmatmul.mubr.f32.gmra.mxu0 %v46
  %v251 = vpop.f32.mrf.mxu0
  %v252 = vadd.f32 %v169, %v251
  %v253 = vpop.f32.mrf.mxu0
  %254 = vdwg.mxu0
  %255 = vmatprep.subr.mxu0 0.0
  %256 = vmatpush1.msra.mxu0 %v132
  %257 = vmatprep.subr.mxu0 0.0
  %258 = vmatpush1.msra.mxu0 %v131
  %259 = vmatprep.subr.mxu0 0.0
  %260 = vmatpush1.msra.mxu0 %v130
  %261 = vmatprep.subr.mxu0 0.0
  %262 = vmatpush1.msra.mxu0 %v129
  %263 = vmatprep.subr.mxu0 0.0
  %264 = vmatpush1.msra.mxu0 %v128
  %265 = vmatprep.subr.mxu0 0.0
  %266 = vmatpush1.msra.mxu0 %v127
  %267 = vmatprep.subr.mxu0 0.0
  %268 = vmatpush1.msra.mxu0 %v126
  %269 = vmatprep.subr.mxu0 0.0
  %270 = vmatpush1.msra.mxu0 %v125
  %271 = vmatprep.subr.mxu0 0.0
  %272 = vmatpush1.msra.mxu0 %v124
  %273 = vmatprep.subr.mxu0 0.0
  %274 = vmatpush1.msra.mxu0 %v123
  %275 = vmatprep.subr.mxu0 0.0
  %276 = vmatpush1.msra.mxu0 %v122
  %277 = vmatprep.subr.mxu0 0.0
  %278 = vmatpush1.msra.mxu0 %v121
  %279 = vmatprep.subr.mxu0 0.0
  %280 = vmatpush1.msra.mxu0 %v120
  %281 = vmatprep.subr.mxu0 0.0
  %282 = vmatpush1.msra.mxu0 %v119
  %283 = vmatprep.subr.mxu0 0.0
  %284 = vmatpush1.msra.mxu0 %v118
  %285 = vmatprep.subr.mxu0 0.0
  %286 = vmatpush1.msra.mxu0 %v117
  %287 = vmatprep.subr.mxu0 0.0
  %288 = vmatpush2.msra.mxu0 %v148
  %289 = vmatprep.subr.mxu0 0.0
  %290 = vmatpush2.msra.mxu0 %v147
  %291 = vmatprep.subr.mxu0 0.0
  %292 = vmatpush2.msra.mxu0 %v146
  %293 = vmatprep.subr.mxu0 0.0
  %294 = vmatpush2.msra.mxu0 %v145
  %295 = vmatprep.subr.mxu0 0.0
  %296 = vmatpush2.msra.mxu0 %v144
  %297 = vmatprep.subr.mxu0 0.0
  %298 = vmatpush2.msra.mxu0 %v143
  %299 = vmatprep.subr.mxu0 0.0
  %300 = vmatpush2.msra.mxu0 %v142
  %301 = vmatprep.subr.mxu0 0.0
  %302 = vmatpush2.msra.mxu0 %v141
  %303 = vmatprep.subr.mxu0 0.0
  %304 = vmatpush2.msra.mxu0 %v140
  %305 = vmatprep.subr.mxu0 0.0
  %306 = vmatpush2.msra.mxu0 %v139
  %307 = vmatprep.subr.mxu0 0.0
  %308 = vmatpush2.msra.mxu0 %v138
  %309 = vmatprep.subr.mxu0 0.0
  %310 = vmatpush2.msra.mxu0 %v137
  %311 = vmatprep.subr.mxu0 0.0
  %312 = vmatpush2.msra.mxu0 %v136
  %313 = vmatprep.subr.mxu0 0.0
  %314 = vmatpush2.msra.mxu0 %v135
  %315 = vmatprep.subr.mxu0 0.0
  %316 = vmatpush2.msra.mxu0 %v134
  %317 = vmatprep.subr.mxu0 0.0
  %318 = vmatpush2.msra.mxu0 %v133
  %319 = vmatprep.mubr.f32.mxu0 %v74
  %320 = vmatmul.mubr.f32.gmra.mxu0 %v65
  %v321 = vpop.f32.mrf.mxu0
  %v322 = vadd.f32 %v237, %v321
  %v323 = vpop.f32.mrf.mxu0
  %324 = vmatprep.mubr.f32.mxu0 %v73
  %325 = vmatmul.mubr.f32.gmra.mxu0 %v64
  %v326 = vpop.f32.mrf.mxu0
  %v327 = vadd.f32 %v242, %v326
  %v328 = vpop.f32.mrf.mxu0
  %329 = vmatprep.mubr.f32.mxu0 %v72
  %330 = vmatmul.mubr.f32.gmra.mxu0 %v63
  %v331 = vpop.f32.mrf.mxu0
  %v332 = vadd.f32 %v247, %v331
  %v333 = vpop.f32.mrf.mxu0
  %334 = vmatprep.mubr.f32.mxu0 %v75
  %335 = vmatmul.mubr.f32.gmra.mxu0 %v66
  %v336 = vpop.f32.mrf.mxu0
  %v337 = vadd.f32 %v252, %v336
  %v338 = vpop.f32.mrf.mxu0
  %339 = vdwg.mxu0
  %340 = vmatprep.subr.mxu0 0.0
  %341 = vmatpush1.msra.mxu0 %v164
  %342 = vmatprep.subr.mxu0 0.0
  %343 = vmatpush1.msra.mxu0 %v163
  %344 = vmatprep.subr.mxu0 0.0
  %345 = vmatpush1.msra.mxu0 %v162
  %346 = vmatprep.subr.mxu0 0.0
  %347 = vmatpush1.msra.mxu0 %v161
  %348 = vmatprep.subr.mxu0 0.0
  %349 = vmatpush1.msra.mxu0 %v160
  %350 = vmatprep.subr.mxu0 0.0
  %351 = vmatpush1.msra.mxu0 %v159
  %352 = vmatprep.subr.mxu0 0.0
  %353 = vmatpush1.msra.mxu0 %v158
  %354 = vmatprep.subr.mxu0 0.0
  %355 = vmatpush1.msra.mxu0 %v157
  %356 = vmatprep.subr.mxu0 0.0
  %357 = vmatpush1.msra.mxu0 %v156
  %358 = vmatprep.subr.mxu0 0.0
  %359 = vmatpush1.msra.mxu0 %v155
  %360 = vmatprep.subr.mxu0 0.0
  %361 = vmatpush1.msra.mxu0 %v154
  %362 = vmatprep.subr.mxu0 0.0
  %363 = vmatpush1.msra.mxu0 %v153
  %364 = vmatprep.subr.mxu0 0.0
  %365 = vmatpush1.msra.mxu0 %v152
  %366 = vmatprep.subr.mxu0 0.0
  %367 = vmatpush1.msra.mxu0 %v151
  %368 = vmatprep.subr.mxu0 0.0
  %369 = vmatpush1.msra.mxu0 %v150
  %370 = vmatprep.subr.mxu0 0.0
  %371 = vmatpush1.msra.mxu0 %v149
  %372 = vmatprep.subr.mxu0 0.0
  %373 = vmatpush2.msra.mxu0 0.0
  %374 = vmatprep.subr.mxu0 0.0
  %375 = vmatpush2.msra.mxu0 0.0
  %376 = vmatprep.subr.mxu0 0.0
  %377 = vmatpush2.msra.mxu0 0.0
  %378 = vmatprep.subr.mxu0 0.0
  %379 = vmatpush2.msra.mxu0 0.0
  %380 = vmatprep.subr.mxu0 0.0
  %381 = vmatpush2.msra.mxu0 0.0
  %382 = vmatprep.subr.mxu0 0.0
  %383 = vmatpush2.msra.mxu0 0.0
  %384 = vmatprep.subr.mxu0 0.0
  %385 = vmatpush2.msra.mxu0 0.0
  %386 = vmatprep.subr.mxu0 0.0
  %387 = vmatpush2.msra.mxu0 0.0
  %388 = vmatprep.subr.mxu0 0.0
  %389 = vmatpush2.msra.mxu0 0.0
  %390 = vmatprep.subr.mxu0 0.0
  %391 = vmatpush2.msra.mxu0 0.0
  %392 = vmatprep.subr.mxu0 0.0
  %393 = vmatpush2.msra.mxu0 0.0
  %394 = vmatprep.subr.mxu0 0.0
  %395 = vmatpush2.msra.mxu0 0.0
  %396 = vmatprep.subr.mxu0 0.0
  %397 = vmatpush2.msra.mxu0 0.0
  %398 = vmatprep.subr.mxu0 0.0
  %399 = vmatpush2.msra.mxu0 0.0
  %400 = vmatprep.subr.mxu0 0.0
  %401 = vmatpush2.msra.mxu0 0.0
  %402 = vmatprep.subr.mxu0 0.0
  %403 = vmatpush2.msra.mxu0 0.0
  %404 = vmatprep.mubr.f32.mxu0 0.0
  %405 = vmatmul.mubr.f32.gmra.mxu0 %v83
  %v406 = vpop.f32.mrf.mxu0
  %v407 = vadd.f32 %v322, %v406
  %v408 = vpop.f32.mrf.mxu0
  %409 = vmatprep.mubr.f32.mxu0 0.0
  %410 = vmatmul.mubr.f32.gmra.mxu0 %v82
  %v411 = vpop.f32.mrf.mxu0
  %v412 = vadd.f32 %v327, %v411
  %v413 = vpop.f32.mrf.mxu0
  %414 = vmatprep.mubr.f32.mxu0 0.0
  %415 = vmatmul.mubr.f32.gmra.mxu0 %v81
  %v416 = vpop.f32.mrf.mxu0
  %v417 = vadd.f32 %v332, %v416
  %v418 = vpop.f32.mrf.mxu0
  %419 = vmatprep.mubr.f32.mxu0 0.0
  %420 = vmatmul.mubr.f32.gmra.mxu0 %v84
  %v421 = vpop.f32.mrf.mxu0
  %v422 = vadd.f32 %v337, %v421
  %v423 = vpop.f32.mrf.mxu0
  %424 = vdwg.mxu0
  %v425 = vmax.f32 %v407, 0.0
  %v426 = vmax.f32 %v412, 0.0
  %v427 = vmax.f32 %v417, 0.0
  %v428 = vmax.f32 %v422, 0.0
  %v429 = vld [vmem:[%s3] sm:$0xff]
  %v430 = vld [vmem:[%s3 + $0x8] sm:$0xff]
  %v431 = vld [vmem:[%s3 + $0x10] sm:$0xff]
  %v432 = vld [vmem:[%s3 + $0x18] sm:$0xff]
  %v433 = vmul.f32 %v425, %v429
  %v434 = vmul.f32 %v426, %v430
  %v435 = vmul.f32 %v427, %v431
  %v436 = vmul.f32 %v428, %v432
  %vm437 = vcmask 195584
  %v438 = vsel %vm437, %v433, -inf
  %v439 = vsel %vm437, %v434, -inf
  %v440 = vmax.f32 %v438, %v439
  %v441 = vrot.slane %v440, 4
  %v442 = vmax.f32 %v440, %v441
  %v443 = vrot.slane %v442, 2
  %v444 = vmax.f32 %v442, %v443
  %v445 = vrot.slane %v444, 1
  %v446 = vmax.f32 %v444, %v445
  %v447 = vsel %vm437, %v435, -inf
  %v448 = vsel %vm437, %v436, -inf
  %v449 = vmax.f32 %v447, %v448
  %v450 = vrot.slane %v449, 4
  %v451 = vmax.f32 %v449, %v450
  %v452 = vrot.slane %v451, 2
  %v453 = vmax.f32 %v451, %v452
  %v454 = vrot.slane %v453, 1
  %v455 = vmax.f32 %v453, %v454
  %vm456 = vcmask 1040384
  %v457 = vsel %vm456, %v446, %v455
  %v458 = vlaneseq
  %v459 = vshrl.u32 %v458, 7
  %v460 = vsub.s32 1, %v459
  %v461 = vrot.slane %v165, %v460
  %v462 = vmul.f32 %v457, %v461
  %vm463 = vcmask 189440
  %v464 = vsel %vm463, %v462, 0.0
  %465 = vadd.xlane.f32.xlu0 %v464
  %v466 = vpop.xlane.xlu0 %465
  %v467 = vlaneseq
  %v468 = vshrl.u32 %v467, 7
  %v469 = vsub.s32 2, %v468
  %v470 = vrot.slane %v165, %v469
  %v471 = vadd.f32 %v466, %v470
  %vm472 = vcmask 1024
  %473 = vst.msk [vmem:[%s4] sm:$0x3] %vm472, %v471
  // Predicated region
  $region18: #{textcnn_forward.1} parent=0 // pred_check
    _
  $region19: #{textcnn_forward.1} parent=0 // pred_check_branch
    %475 = sbr.rel (0) target = $region21
  $region20: #{textcnn_forward.1} parent=0 // pred_region
    _
  $region21: #{textcnn_forward.1} parent=0 // pred_fallthru
    _
  // Predicated region
  $region22: #{textcnn_forward.1} parent=0 // pred_check
    _
  $region23: #{textcnn_forward.1} parent=0 // pred_check_branch
    %477 = sbr.rel (0) target = $region25
  $region24: #{textcnn_forward.1} parent=0 // pred_region
    _
  $region25: #{textcnn_forward.1} parent=0 // pred_fallthru
    _

</llo_original>
